<compile_context>
chip_gen: v6e
topology: v6e:2x2x1
jax: 0.10.0
libtpu: 0.0.40
codegen_flags: <defaults>
</compile_context>

<pallas_src>
import functools

import numpy as np
import jax
import jax.numpy as jnp
from jax.experimental import pallas as pl
from jax.experimental.pallas import tpu as pltpu

_LANE = 128
_MIB = 1024 * 1024


def _cdiv(a, b):
    return -(-a // b)


def _hw_config():
    """Per-generation defaults: (num_splits, tile_budget_bytes, vmem_limit_bytes)."""
    kind = ""
    try:
        kind = jax.devices()[0].device_kind.lower()
    except Exception:
        pass
    vmem_cap = None
    try:
        info = pltpu.get_tpu_info()
        for attr in ("vmem_capacity_bytes", "vmem_size_bytes", "vmem_bytes"):
            cap = getattr(info, attr, None)
            if cap:
                vmem_cap = int(cap)
                break
    except Exception:
        pass

    is_v7 = ("7x" in kind) or ("v7" in kind)
    if is_v7:
        num_splits, vmem_limit = 2, 52 * _MIB        # 64 MiB physical, 2 TensorCores
    elif ("v6" in kind) or ("v5" in kind):
        num_splits, vmem_limit = 1, 100 * _MIB       # 128 MiB physical, 1 TC
    elif ("v3" in kind) or ("v2" in kind):
        num_splits, vmem_limit = 1, 12 * _MIB
    else:
        num_splits, vmem_limit = 1, 48 * _MIB        # unknown: previously-safe value
    if vmem_cap is not None:
        vmem_limit = min(vmem_limit, int(vmem_cap * 0.82))
        if (not is_v7) and vmem_cap <= 64 * _MIB:
            num_splits = 2                           # small-VMEM dual-core heuristic
    tile_budget = max(512 * 1024, int(vmem_limit * 0.28))
    return num_splits, tile_budget, vmem_limit


def _choose_tile_d(n_rows, dim, itemsize, budget_bytes):
    """Largest lane-aligned feature tile that fits the per-buffer budget."""
    max_elems = max(_LANE, budget_bytes // max(1, n_rows * itemsize))
    if dim <= max_elems:
        return dim                      # single full-width tile (any width OK)
    return max(_LANE, (max_elems // _LANE) * _LANE)


# ----------------------------------------------------------------------------
# In-kernel helpers
# ----------------------------------------------------------------------------
def _line_solver(v1v1, v1v2, v2v2):
    """Same branch structure as the PyTorch line_solver, guarded denominator."""
    denom = v1v1 + v2v2 - 2.0 * v1v2
    safe = jnp.where(denom == 0.0, jnp.float32(1.0), denom)
    frac = (v2v2 - v1v2) / safe
    return jnp.where(v1v2 >= v1v1, jnp.float32(0.999),
                     jnp.where(v1v2 >= v2v2, jnp.float32(0.001), frac))


def _fw_iterate(G, n, max_iter, stop_crit):
    """Frank-Wolfe loop with real early exit; returns (1, n) f32 simplex weights."""
    iota_row = jax.lax.broadcasted_iota(jnp.int32, (1, n), 1)
    iota_col = jax.lax.broadcasted_iota(jnp.int32, (n, 1), 0)
    crit = jnp.float32(stop_crit)

    def cond(carry):
        it, done, _, _ = carry
        return jnp.logical_and(it < max_iter, done == 0)

    def body(carry):
        it, done, sol_row, sol_col = carry
        gds_col = jnp.sum(G * sol_row, axis=1, keepdims=True)   # G @ sol, (n,1)
        m = jnp.min(gds_col)
        t = jnp.min(jnp.where(gds_col == m, iota_col, n))       # first argmin
        oh_row = (iota_row == t).astype(jnp.float32)
        oh_col = (iota_col == t).astype(jnp.float32)

        v1v1 = jnp.sum(sol_col * gds_col)                       # sol . G sol
        v1v2 = m                                                # = (G@sol)[t] (G symmetric)
        v2v2 = jnp.sum(G * (oh_col * oh_row))                   # G[t, t]
        gamma = _line_solver(v1v1, v1v2, v2v2)

        new_row = gamma * sol_row + (1.0 - gamma) * oh_row
        new_col = gamma * sol_col + (1.0 - gamma) * oh_col
        change = jnp.sum(jnp.abs(new_col - sol_col))
        done = jnp.where(change < crit, jnp.int32(1), jnp.int32(0))
        return it + 1, done, new_row, new_col

    inv_n = jnp.float32(1.0 / n)
    init = (jnp.int32(0), jnp.int32(0),
            jnp.full((1, n), inv_n, jnp.float32),
            jnp.full((n, 1), inv_n, jnp.float32))
    _, _, sol_row, _ = jax.lax.while_loop(cond, body, init)
    return sol_row


def _accumulate_gram(vecs_ref, acc_ref, t, *, tile_d, dim, t_total, may_oob):
    """acc += v_tile @ v_tile.T with pl.when-gated masking / OOB-tile skip."""
    has_ragged = (dim % tile_d) != 0

    def _acc(mask_cols):
        v = vecs_ref[...]
        if mask_cols:
            col0 = t * tile_d
            lane = jax.lax.broadcasted_iota(jnp.int32, (1, tile_d), 1)
            v = jnp.where(col0 + lane < dim, v, jnp.zeros_like(v))
        acc_ref[...] += jax.lax.dot_general(
            v, v, (((1,), (1,)), ((), ())),
            preferred_element_type=jnp.float32)

    if has_ragged or may_oob:
        n_full = t_total - 1 if has_ragged else t_total
        if n_full > 0:
            pl.when(t < n_full)(lambda: _acc(False))        # full in-range tiles
        if has_ragged:
            pl.when(t == t_total - 1)(lambda: _acc(True))   # only ragged tile masks
        # t >= t_total (clamped duplicates): skip compute entirely.
    else:
        _acc(False)                                         # no gating overhead


# ----------------------------------------------------------------------------
# Kernels
# ----------------------------------------------------------------------------
def _gram_kernel(vecs_ref, gram_ref, *, tile_d, dim, t_half, t_total, may_oob):
    """Accumulate one partial Gram matrix per 'split' of the feature dim."""
    p = pl.program_id(0)                # split index (parallel -> megacore on v7x)
    j = pl.program_id(1)                # tile within the split (reduction axis)

    @pl.when(j == 0)
    def _():
        gram_ref[...] = jnp.zeros_like(gram_ref)

    _accumulate_gram(vecs_ref, gram_ref, p * t_half + j,
                     tile_d=tile_d, dim=dim, t_total=t_total, may_oob=may_oob)


def _gram_fw_kernel(vecs_ref, out_ref, acc_ref, *, tile_d, dim, t_total,
                    n_tasks, max_iter, stop_crit):
    """Single-split path: stream Gram accumulation, FW solve on the last tile."""
    j = pl.program_id(0)

    @pl.when(j == 0)
    def _():
        acc_ref[...] = jnp.zeros_like(acc_ref)

    _accumulate_gram(vecs_ref, acc_ref, j, tile_d=tile_d, dim=dim,
                     t_total=t_total, may_oob=False)

    @pl.when(j == t_total - 1)
    def _():
        out_ref[...] = _fw_iterate(acc_ref[...], n_tasks, max_iter, stop_crit)


def _fw_solve_kernel(parts_ref, out_ref, *, n_tasks, max_iter, stop_crit,
                     num_parts):
    """Sum partial Grams and run the Frank-Wolfe loop (two-pass / split path)."""
    G = parts_ref[0]
    for h in range(1, num_parts):
        G = G + parts_ref[h]
    out_ref[...] = _fw_iterate(G, n_tasks, max_iter, stop_crit)


def _combine2_kernel(parts_ref, vecs_ref, out_ref, *, num_parts):
    """n_tasks == 2 (two-pass): write gamma*v0 + (1-gamma)*v1 tile by tile."""
    G = parts_ref[0]
    for h in range(1, num_parts):
        G = G + parts_ref[h]
    gamma = _line_solver(G[0, 0], G[0, 1], G[1, 1])
    v = vecs_ref[...].astype(jnp.float32)
    out = gamma * v[0:1, :] + (1.0 - gamma) * v[1:2, :]
    out_ref[...] = out.astype(out_ref.dtype)


def _fused2_kernel(vecs_ref, out_ref):
    """n_tasks == 2, both rows VMEM-resident: one read pass, one write pass."""
    v = vecs_ref[...]
    G = jax.lax.dot_general(v, v, (((1,), (1,)), ((), ())),
                            preferred_element_type=jnp.float32)
    gamma = _line_solver(G[0, 0], G[0, 1], G[1, 1])
    vf = v.astype(jnp.float32)
    out = gamma * vf[0:1, :] + (1.0 - gamma) * vf[1:2, :]
    out_ref[...] = out.astype(out_ref.dtype)


# ----------------------------------------------------------------------------
# pallas_call wrappers
# ----------------------------------------------------------------------------
def _partial_grams(vecs, num_splits, tile_budget, vmem_limit):
    n_tasks, dim = vecs.shape
    itemsize = vecs.dtype.itemsize
    tile_d = _choose_tile_d(n_tasks, dim, itemsize, tile_budget)
    t_total = _cdiv(dim, tile_d)
    num_splits = max(1, min(num_splits, t_total))
    t_half = _cdiv(t_total, num_splits)
    may_oob = num_splits * t_half > t_total

    def vecs_index_map(p, j):
        t = p * t_half + j
        return (0, jnp.minimum(t, t_total - 1))   # clamp: DMA never walks OOB

    kernel = functools.partial(_gram_kernel, tile_d=tile_d, dim=dim,
                               t_half=t_half, t_total=t_total, may_oob=may_oob)
    return pl.pallas_call(
        kernel,
        out_shape=jax.ShapeDtypeStruct((num_splits, n_tasks, n_tasks),
                                       jnp.float32),
        grid=(num_splits, t_half),
        in_specs=[pl.BlockSpec((n_tasks, tile_d), vecs_index_map)],
        out_specs=pl.BlockSpec((None, n_tasks, n_tasks), lambda p, j: (p, 0, 0)),
        compiler_params=pltpu.CompilerParams(
            dimension_semantics=("parallel", "arbitrary"),
            vmem_limit_bytes=vmem_limit),
        cost_estimate=pl.CostEstimate(
            flops=2 * n_tasks * n_tasks * dim,
            transcendentals=0,
            bytes_accessed=n_tasks * dim * itemsize
                           + num_splits * n_tasks * n_tasks * 4),
    )(vecs)


def _gram_fw_fused(vecs, max_iter, stop_crit, tile_budget, vmem_limit):
    n_tasks, dim = vecs.shape
    itemsize = vecs.dtype.itemsize
    tile_d = _choose_tile_d(n_tasks, dim, itemsize, tile_budget)
    t_total = _cdiv(dim, tile_d)
    kernel = functools.partial(_gram_fw_kernel, tile_d=tile_d, dim=dim,
                               t_total=t_total, n_tasks=n_tasks,
                               max_iter=max_iter, stop_crit=stop_crit)
    out = pl.pallas_call(
        kernel,
        out_shape=jax.ShapeDtypeStruct((1, n_tasks), jnp.float32),
        grid=(t_total,),
        in_specs=[pl.BlockSpec((n_tasks, tile_d), lambda j: (0, j))],
        out_specs=pl.BlockSpec((1, n_tasks), lambda j: (0, 0)),
        scratch_shapes=[pltpu.VMEM((n_tasks, n_tasks), jnp.float32)],
        compiler_params=pltpu.CompilerParams(
            dimension_semantics=("arbitrary",),
            vmem_limit_bytes=vmem_limit),
        cost_estimate=pl.CostEstimate(
            flops=2 * n_tasks * n_tasks * dim,
            transcendentals=0,
            bytes_accessed=n_tasks * dim * itemsize + n_tasks * 4),
    )(vecs)
    return out[0]


def _fw_solve(partial_grams, n_tasks, max_iter, stop_crit):
    num_parts = partial_grams.shape[0]
    kernel = functools.partial(_fw_solve_kernel, n_tasks=n_tasks,
                               max_iter=max_iter, stop_crit=stop_crit,
                               num_parts=num_parts)
    out = pl.pallas_call(
        kernel,
        out_shape=jax.ShapeDtypeStruct((1, n_tasks), jnp.float32),
        grid=(1,),
        in_specs=[pl.BlockSpec((num_parts, n_tasks, n_tasks),
                               lambda i: (0, 0, 0))],
        out_specs=pl.BlockSpec((1, n_tasks), lambda i: (0, 0)),
        compiler_params=pltpu.CompilerParams(
            dimension_semantics=("arbitrary",)),
    )(partial_grams)
    return out[0]


def _combine_two(vecs, partial_grams, tile_budget, vmem_limit):
    _, dim = vecs.shape
    itemsize = vecs.dtype.itemsize
    # 2 input rows + 1 output row share the budget.
    tile_d = _choose_tile_d(3, dim, itemsize, tile_budget)
    t_total = _cdiv(dim, tile_d)
    num_parts = partial_grams.shape[0]
    kernel = functools.partial(_combine2_kernel, num_parts=num_parts)
    out = pl.pallas_call(
        kernel,
        out_shape=jax.ShapeDtypeStruct((1, dim), vecs.dtype),
        grid=(t_total,),
        in_specs=[pl.BlockSpec((num_parts, 2, 2), lambda t: (0, 0, 0)),
                  pl.BlockSpec((2, tile_d), lambda t: (0, t))],
        out_specs=pl.BlockSpec((1, tile_d), lambda t: (0, t)),
        compiler_params=pltpu.CompilerParams(
            dimension_semantics=("parallel",),
            vmem_limit_bytes=vmem_limit),
        cost_estimate=pl.CostEstimate(
            flops=3 * dim, transcendentals=0,
            bytes_accessed=3 * dim * itemsize),
    )(partial_grams, vecs)
    return out[0]


def _fused_two(vecs, vmem_limit):
    _, dim = vecs.shape
    out = pl.pallas_call(
        _fused2_kernel,
        out_shape=jax.ShapeDtypeStruct((1, dim), vecs.dtype),
        grid=(1,),
        in_specs=[pl.BlockSpec((2, dim), lambda i: (0, 0))],
        out_specs=pl.BlockSpec((1, dim), lambda i: (0, 0)),
        compiler_params=pltpu.CompilerParams(
            dimension_semantics=("arbitrary",),
            vmem_limit_bytes=vmem_limit),
        cost_estimate=pl.CostEstimate(
            flops=7 * dim, transcendentals=0,
            bytes_accessed=3 * dim * vecs.dtype.itemsize),
    )(vecs)
    return out[0]


def min_norm_solver_fw(vecs, max_iter=250, stop_crit=1e-6,
                       num_splits=None, tile_budget_bytes=None,
                       vmem_limit_bytes=None, fuse_n2=None):
    """Forward pass of MinNormSolverFW (same semantics as the PyTorch module)."""
    vecs = jnp.asarray(vecs)
    if vecs.dtype not in (jnp.float32, jnp.bfloat16):
        vecs = vecs.astype(jnp.float32)
    n_tasks, dim = vecs.shape

    auto_splits, auto_budget, auto_limit = _hw_config()
    num_splits = auto_splits if num_splits is None else int(num_splits)
    tile_budget = auto_budget if tile_budget_bytes is None else int(tile_budget_bytes)
    vmem_limit = auto_limit if vmem_limit_bytes is None else int(vmem_limit_bytes)
    itemsize = vecs.dtype.itemsize

    if n_tasks == 1:
        return vecs[0]

    if n_tasks == 2:
        # Fused path keeps both rows VMEM-resident: 3*dim HBM traffic vs 5*dim.
        fused_live = 6 * dim * itemsize + 3 * dim * 4
        do_fuse = fuse_n2 if fuse_n2 is not None else (
            fused_live <= vmem_limit - 4 * _MIB)
        if do_fuse:
            return _fused_two(vecs, vmem_limit)
        grams = _partial_grams(vecs, num_splits, tile_budget, vmem_limit)
        return _combine_two(vecs, grams, tile_budget, vmem_limit)

    # n_tasks >= 3
    tile_d = _choose_tile_d(n_tasks, dim, itemsize, tile_budget)
    t_total = _cdiv(dim, tile_d)
    eff_splits = max(1, min(num_splits, t_total))
    if eff_splits == 1:
        # Single-TC streaming: fold the tiny FW solve into the Gram kernel's
        # finalize step -> one launch, no HBM round trip for G.
        return _gram_fw_fused(vecs, max_iter, stop_crit, tile_budget, vmem_limit)
    grams = _partial_grams(vecs, eff_splits, tile_budget, vmem_limit)
    return _fw_solve(grams, n_tasks, max_iter, stop_crit)


# ----------------------------------------------------------------------------
# Pure-numpy reference (mirrors the PyTorch module, float32)
# ----------------------------------------------------------------------------
def _reference(vecs, max_iter=250, stop_crit=1e-6):
    vecs = np.asarray(vecs, dtype=np.float32)
    n = vecs.shape[0]

    def line(v11, v12, v22):
        if v12 >= v11:
            return np.float32(0.999)
        if v12 >= v22:
            return np.float32(0.001)
        return np.float32((v22 - v12) / (v11 + v22 - 2.0 * v12))

    if n == 1:
        return vecs[0]
    if n == 2:
        v11 = float(vecs[0] @ vecs[0])
        v12 = float(vecs[0] @ vecs[1])
        v22 = float(vecs[1] @ vecs[1])
        g = line(v11, v12, v22)
        return g * vecs[0] + (1.0 - g) * vecs[1]

    sol = np.full((n,), 1.0 / n, dtype=np.float32)
    G = vecs @ vecs.T
    for _ in range(max_iter):
        gds = G @ sol
        t = int(np.argmin(gds))
        v11 = float(sol @ gds)
        v12 = float(sol @ G[:, t])
        v22 = float(G[t, t])
        g = line(v11, v12, v22)
        new_sol = g * sol
        new_sol[t] += 1.0 - g
        if np.abs(new_sol - sol).sum() < stop_crit:
            return new_sol
        sol = new_sol
    return sol


if __name__ == "__main__":
    key = jax.random.PRNGKey(0)
    k0, k1 = jax.random.split(key)

    # dim deliberately not a multiple of 128 and chosen so that the small
    # tile budget (tile_d=256 -> 11 tiles) exercises BOTH the ragged-tile
    # lane mask and the clamped out-of-range duplicate tile of the split path.
    n_tasks, dim = 4, 2600

    # ---- general path (n_tasks >= 3) --------------------------------------
    vecs = jax.random.normal(k0, (n_tasks, dim), dtype=jnp.float32)
    sols = [
        min_norm_solver_fw(vecs),                                          # auto config
        min_norm_solver_fw(vecs, num_splits=1, tile_budget_bytes=4096),    # fused Gram+FW, ragged mask
        min_norm_solver_fw(vecs, num_splits=2, tile_budget_bytes=4096),    # split + OOB-skip + 2-pass solve
    ]
    sols = [jax.block_until_ready(s) for s in sols]

    ref = _reference(np.asarray(vecs))
    G = np.asarray(vecs) @ np.asarray(vecs).T
    obj_r = float(ref @ G @ ref)
    for s in sols:
        s = np.asarray(s)
        assert s.shape == (n_tasks,)
        assert np.all(np.isfinite(s))
        assert np.all(s >= -1e-5)
        assert abs(float(s.sum()) - 1.0) < 1e-3
        obj_k = float(s @ G @ s)
        assert abs(obj_k - obj_r) <= 1e-2 * max(1.0, abs(obj_r))

    # ---- n_tasks == 2 path (returns the combined gradient vector) ---------
    vecs2 = jax.random.normal(k1, (2, dim), dtype=jnp.float32)
    outs2 = [
        min_norm_solver_fw(vecs2),                                          # fused resident path
        min_norm_solver_fw(vecs2, fuse_n2=False, num_splits=1,
                           tile_budget_bytes=4096),                         # two-pass, 1 split
        min_norm_solver_fw(vecs2, fuse_n2=False, num_splits=2,
                           tile_budget_bytes=4096),                         # two-pass, 2 splits
    ]
    outs2 = [jax.block_until_ready(o) for o in outs2]
    ref2 = _reference(np.asarray(vecs2))
    for o in outs2:
        np.testing.assert_allclose(np.asarray(o), ref2, atol=1e-3, rtol=1e-3)

    # ---- n_tasks == 1 path -------------------------------------------------
    out1 = jax.block_until_ready(min_norm_solver_fw(vecs[:1]))
    np.testing.assert_allclose(np.asarray(out1), np.asarray(vecs[0]))

    print("KERNEL_OK")
</pallas_src>

<mosaic_0001>
module attributes {stable_mosaic.version = 11 : i64} {
  func.func @_gram_fw_kernel(%arg0: i32, %arg1: memref<4x2600xf32, #tpu.memory_space<vmem>>, %arg2: memref<1x4xf32, #tpu.memory_space<vmem>>, %arg3: memref<4x4xf32, #tpu.memory_space<vmem>>) attributes {dimension_semantics = [#tpu.dimension_semantics<arbitrary>], iteration_bounds = array<i64: 1>, scalar_prefetch = 0 : i64, scratch_operands = 1 : i64, tpu.core_type = #tpu.core_type<tc>, window_params = [{transform_indices = @transform_0, window_bounds = array<i64: 4, 2600>}, {pipeline_mode = #tpu.pipeline_mode<synchronous>, transform_indices = @transform_1, window_bounds = array<i64: 1, 4>}]} {
    %c0_i32 = arith.constant 0 : i32
    %0 = arith.cmpi eq, %arg0, %c0_i32 : i32
    %1 = arith.extui %0 : i1 to i32
    %c0_i32_0 = arith.constant 0 : i32
    %2 = arith.cmpi ne, %1, %c0_i32_0 : i32
    scf.if %2 {
      %cst_8 = arith.constant 0.000000e+00 : f32
      %11 = vector.broadcast %cst_8 : f32 to vector<4x4xf32>
      %c0_9 = arith.constant 0 : index
      %c0_10 = arith.constant 0 : index
      %12 = vector.load %arg3[%c0_9, %c0_10] : memref<4x4xf32, #tpu.memory_space<vmem>>, vector<4x4xf32>
      tpu.vector_store %arg3[%c0_9, %c0_10], %11 {strides = array<i32>} : memref<4x4xf32, #tpu.memory_space<vmem>>, vector<4x4xf32>,
    } else {
    }
    %c0 = arith.constant 0 : index
    %c0_1 = arith.constant 0 : index
    %3 = vector.load %arg1[%c0, %c0_1] : memref<4x2600xf32, #tpu.memory_space<vmem>>, vector<4x2600xf32>
    %c0_2 = arith.constant 0 : index
    %c0_3 = arith.constant 0 : index
    %4 = vector.load %arg3[%c0_2, %c0_3] : memref<4x4xf32, #tpu.memory_space<vmem>>, vector<4x4xf32>
    %cst = arith.constant dense<0.000000e+00> : vector<4x4xf32>
    %5 = tpu.matmul %3, %3, %cst {dimension_numbers = #tpu.dot_dimension_numbers<[1], [1], [0], [0], [0, 0, 1, 0], [], []>} : vector<4x2600xf32>, vector<4x2600xf32>, vector<4x4xf32> -> vector<4x4xf32>
    %6 = arith.addf %4, %5 : vector<4x4xf32>
    %c0_4 = arith.constant 0 : index
    %c0_5 = arith.constant 0 : index
    %7 = vector.load %arg3[%c0_4, %c0_5] : memref<4x4xf32, #tpu.memory_space<vmem>>, vector<4x4xf32>
    tpu.vector_store %arg3[%c0_4, %c0_5], %6 {strides = array<i32>} : memref<4x4xf32, #tpu.memory_space<vmem>>, vector<4x4xf32>,
    %c0_i32_6 = arith.constant 0 : i32
    %8 = arith.cmpi eq, %arg0, %c0_i32_6 : i32
    %9 = arith.extui %8 : i1 to i32
    %c0_i32_7 = arith.constant 0 : i32
    %10 = arith.cmpi ne, %9, %c0_i32_7 : i32
    scf.if %10 {
      %c0_8 = arith.constant 0 : index
      %c0_9 = arith.constant 0 : index
      %11 = vector.load %arg3[%c0_8, %c0_9] : memref<4x4xf32, #tpu.memory_space<vmem>>, vector<4x4xf32>
      %12 = tpu.iota {dimensions = array<i32: 1>} : vector<1x4xi32>
      %13 = tpu.iota {dimensions = array<i32: 0>} : vector<4x1xi32>
      %cst_10 = arith.constant 2.500000e-01 : f32
      %14 = vector.broadcast %cst_10 : f32 to vector<1x4xf32>
      %cst_11 = arith.constant 2.500000e-01 : f32
      %15 = vector.broadcast %cst_11 : f32 to vector<4x1xf32>
      %cst_12 = arith.constant 9.99999997E-7 : f32
      %c0_i32_13 = arith.constant 0 : i32
      %c0_i32_14 = arith.constant 0 : i32
      %16:4 = scf.while (%arg4 = %c0_i32_13, %arg5 = %c0_i32_14, %arg6 = %14, %arg7 = %15) : (i32, i32, vector<1x4xf32>, vector<4x1xf32>) -> (i32, i32, vector<1x4xf32>, vector<4x1xf32>) {
        %c250_i32 = arith.constant 250 : i32
        %18 = arith.cmpi slt, %arg4, %c250_i32 : i32
        %c0_i32_17 = arith.constant 0 : i32
        %19 = arith.cmpi eq, %arg5, %c0_i32_17 : i32
        %20 = arith.andi %18, %19 : i1
        scf.condition(%20) %arg4, %arg5, %arg6, %arg7 : i32, i32, vector<1x4xf32>, vector<4x1xf32>
      } do {
      ^bb0(%arg4: i32, %arg5: i32, %arg6: vector<1x4xf32>, %arg7: vector<4x1xf32>):
        %18 = vector.broadcast %arg6 : vector<1x4xf32> to vector<4x4xf32>
        %19 = arith.mulf %11, %18 : vector<4x4xf32>
        %cst_17 = arith.constant dense<0.000000e+00> : vector<4xf32>
        %20 = vector.multi_reduction <add>, %19, %cst_17 [1] : vector<4x4xf32> to vector<4xf32>
        %21 = vector.shape_cast %20 : vector<4xf32> to vector<4x1xf32>
        %22 = vector.shape_cast %21 : vector<4x1xf32> to vector<1x4x1xf32>
        %cst_18 = arith.constant dense<0x7F800000> : vector<1xf32>
        %23 = vector.multi_reduction <minimumf>, %22, %cst_18 [1, 2] : vector<1x4x1xf32> to vector<1xf32>
        %24 = vector.shape_cast %23 : vector<1xf32> to vector<1x1x1xf32>
        %25 = vector.extract %24[0, 0, 0] : f32 from vector<1x1x1xf32>
        %26 = vector.broadcast %25 : f32 to vector<4x1xf32>
        %27 = arith.cmpf oeq, %21, %26 : vector<4x1xf32>
        %c4_i32 = arith.constant 4 : i32
        %28 = vector.broadcast %c4_i32 : i32 to vector<4x1xi32>
        %29 = arith.select %27, %13, %28 : vector<4x1xi1>, vector<4x1xi32>
        %30 = vector.shape_cast %29 : vector<4x1xi32> to vector<1x4x1xi32>
        %cst_19 = arith.constant dense<2147483647> : vector<1xi32>
        %31 = vector.multi_reduction <minsi>, %30, %cst_19 [1, 2] : vector<1x4x1xi32> to vector<1xi32>
        %32 = vector.shape_cast %31 : vector<1xi32> to vector<1x1x1xi32>
        %33 = vector.extract %32[0, 0, 0] : i32 from vector<1x1x1xi32>
        %34 = vector.broadcast %33 : i32 to vector<1x4xi32>
        %35 = arith.cmpi eq, %12, %34 : vector<1x4xi32>
        %36 = arith.extui %35 : vector<1x4xi1> to vector<1x4xi32>
        %37 = arith.sitofp %36 : vector<1x4xi32> to vector<1x4xf32>
        %38 = vector.broadcast %33 : i32 to vector<4x1xi32>
        %39 = arith.cmpi eq, %13, %38 : vector<4x1xi32>
        %40 = arith.extui %39 : vector<4x1xi1> to vector<4x1xi32>
        %41 = arith.sitofp %40 : vector<4x1xi32> to vector<4x1xf32>
        %42 = arith.mulf %arg7, %21 : vector<4x1xf32>
        %43 = vector.shape_cast %42 : vector<4x1xf32> to vector<1x4x1xf32>
        %cst_20 = arith.constant dense<0.000000e+00> : vector<1xf32>
        %44 = vector.multi_reduction <add>, %43, %cst_20 [1, 2] : vector<1x4x1xf32> to vector<1xf32>
        %45 = vector.shape_cast %44 : vector<1xf32> to vector<1x1x1xf32>
        %46 = vector.extract %45[0, 0, 0] : f32 from vector<1x1x1xf32>
        %47 = vector.broadcast %41 : vector<4x1xf32> to vector<4x4xf32>
        %48 = vector.broadcast %37 : vector<1x4xf32> to vector<4x4xf32>
        %49 = arith.mulf %47, %48 : vector<4x4xf32>
        %50 = arith.mulf %11, %49 : vector<4x4xf32>
        %51 = vector.shape_cast %50 : vector<4x4xf32> to vector<1x4x4xf32>
        %cst_21 = arith.constant dense<0.000000e+00> : vector<1xf32>
        %52 = vector.multi_reduction <add>, %51, %cst_21 [1, 2] : vector<1x4x4xf32> to vector<1xf32>
        %53 = vector.shape_cast %52 : vector<1xf32> to vector<1x1x1xf32>
        %54 = vector.extract %53[0, 0, 0] : f32 from vector<1x1x1xf32>
        %55 = arith.addf %46, %54 : f32
        %cst_22 = arith.constant 2.000000e+00 : f32
        %56 = arith.mulf %cst_22, %25 : f32
        %57 = arith.subf %55, %56 : f32
        %cst_23 = arith.constant 0.000000e+00 : f32
        %58 = arith.cmpf oeq, %57, %cst_23 : f32
        %cst_24 = arith.constant 1.000000e+00 : f32
        %59 = arith.select %58, %cst_24, %57 : f32
        %60 = arith.subf %54, %25 : f32
        %61 = arith.divf %60, %59 : f32
        %62 = arith.cmpf oge, %25, %46 : f32
        %63 = arith.cmpf oge, %25, %54 : f32
        %cst_25 = arith.constant 1.000000e-03 : f32
        %64 = arith.select %63, %cst_25, %61 : f32
        %cst_26 = arith.constant 9.990000e-01 : f32
        %65 = arith.select %62, %cst_26, %64 : f32
        %66 = vector.broadcast %65 : f32 to vector<1x4xf32>
        %67 = arith.mulf %66, %arg6 : vector<1x4xf32>
        %cst_27 = arith.constant 1.000000e+00 : f32
        %68 = arith.subf %cst_27, %65 : f32
        %69 = vector.broadcast %68 : f32 to vector<1x4xf32>
        %70 = arith.mulf %69, %37 : vector<1x4xf32>
        %71 = arith.addf %67, %70 : vector<1x4xf32>
        %72 = vector.broadcast %65 : f32 to vector<4x1xf32>
        %73 = arith.mulf %72, %arg7 : vector<4x1xf32>
        %cst_28 = arith.constant 1.000000e+00 : f32
        %74 = arith.subf %cst_28, %65 : f32
        %75 = vector.broadcast %74 : f32 to vector<4x1xf32>
        %76 = arith.mulf %75, %41 : vector<4x1xf32>
        %77 = arith.addf %73, %76 : vector<4x1xf32>
        %78 = arith.subf %77, %arg7 : vector<4x1xf32>
        %79 = math.absf %78 : vector<4x1xf32>
        %80 = vector.shape_cast %79 : vector<4x1xf32> to vector<1x4x1xf32>
        %cst_29 = arith.constant dense<0.000000e+00> : vector<1xf32>
        %81 = vector.multi_reduction <add>, %80, %cst_29 [1, 2] : vector<1x4x1xf32> to vector<1xf32>
        %82 = vector.shape_cast %81 : vector<1xf32> to vector<1x1x1xf32>
        %83 = vector.extract %82[0, 0, 0] : f32 from vector<1x1x1xf32>
        %84 = arith.cmpf olt, %83, %cst_12 : f32
        %c1_i32 = arith.constant 1 : i32
        %c0_i32_30 = arith.constant 0 : i32
        %85 = arith.select %84, %c1_i32, %c0_i32_30 : i32
        %c1_i32_31 = arith.constant 1 : i32
        %86 = arith.addi %arg4, %c1_i32_31 : i32
        scf.yield %86, %85, %71, %77 : i32, i32, vector<1x4xf32>, vector<4x1xf32>
      }
      %c0_15 = arith.constant 0 : index
      %c0_16 = arith.constant 0 : index
      %17 = vector.load %arg2[%c0_15, %c0_16] : memref<1x4xf32, #tpu.memory_space<vmem>>, vector<1x4xf32>
      tpu.vector_store %arg2[%c0_15, %c0_16], %16#2 {strides = array<i32>} : memref<1x4xf32, #tpu.memory_space<vmem>>, vector<1x4xf32>,
    } else {
    }
    return
  }
  func.func @transform_0(%arg0: i32) -> (i32, i32) {
    %c0_i32 = arith.constant 0 : i32
    %c0_i32_0 = arith.constant 0 : i32
    return %c0_i32, %arg0 : i32, i32
  }
  func.func @transform_1(%arg0: i32) -> (i32, i32) {
    %c0_i32 = arith.constant 0 : i32
    %c0_i32_0 = arith.constant 0 : i32
    %c0_i32_1 = arith.constant 0 : i32
    return %c0_i32, %c0_i32_0 : i32, i32
  }
}

</mosaic_0001>

<llo_original>
// kernel: tpu_custom_call.1
$region0: #{tpu_custom_call.1}
  #allocation0 [shape = 'u32[]', space=smem, size = 0x4, offset = 0x4, fixed_abs, tag = 'smem constant byte address 0x4 - core index']
  #allocation1 [shape = 'u32[144,128]{1,0:T(1,128)}', space=vmem, size = 0x12000, scoped, tag = 'internal scratch']
  #allocation2 [shape = 'f32[4,4]{1,0:T(4,128)}', space=vmem, size = 0x800, scoped, tag = 'scratch operand']
  %s0 = inlined_call_operand.hbm [shape: f32[4,2600], index: 0, kind: input, shape index: {}]
  %s1 = inlined_call_operand.hbm [shape: f32[1,4], index: 1, kind: output, shape index: {}]
  %s2 = sld [smem:[#allocation0]]
  $region33: #{tpu_custom_call.1} parent=0
    _
  %s4 = ssub.s32 1, %s2
  %s5 = scalar_select 0, %s4, %s2
  $region1: #{tpu_custom_call.1} parent=0
    #allocation3 [shape = 'u8[43008]{0}', space=vmem, size = 0xa800, scoped, tag = 'input window, operand 0, single buffered']
    #allocation4 [shape = 's32[1]{0}', space=sflag, size = 0x4, scoped, tag = 'scoped memory for tpu_custom_call.1']
    #allocation5 [shape = 's32[1]{0}', space=sflag, size = 0x4, scoped, tag = 'scoped memory for tpu_custom_call.1']
    #allocation6 [shape = 'u8[512]{0}', space=vmem, size = 0x400, scoped, tag = 'output window, operand 0, single buffered']
    %6 = vsyncpa [#allocation4], 0
    %7 = vsyncpa [#allocation5], 0
    // Predicated region
    $region2: #{tpu_custom_call.1} parent=1 // pred_check
      _
    $region3: #{tpu_custom_call.1} parent=1 // pred_check_branch
      %9 = sbr.rel (0) target = $region5
    $region4: #{tpu_custom_call.1} parent=1 // pred_region
      %s11 = ssub.s32 1344, 1344
      %12 = vsyncadd [#allocation4], %s11
      %s14 = sshll.u32 [#allocation3], 4
      %s15 = int_to_ptr.vmem [resolvable:$true] %s14
      %17 = dma.hbm_to_vmem [thread:$0]  %s0, 1344, %s15, [#allocation4]
    $region5: #{tpu_custom_call.1} parent=1 // pred_fallthru
      _
    // Predicated region
    $region6: #{tpu_custom_call.1} parent=1 // pred_check
      _
    $region7: #{tpu_custom_call.1} parent=1 // pred_check_branch
      %19 = sbr.rel (0) target = $region9
    $region8: #{tpu_custom_call.1} parent=1 // pred_region
      %20 = dma.done [#allocation4], 1344
    $region9: #{tpu_custom_call.1} parent=1 // pred_fallthru
      _
    %p21 = scmp.eq.s32.totalorder 0, 0
    // Predicated region
    $region10: #{tpu_custom_call.1} parent=1 // pred_check
      %p22 = pneg %p21
    $region11: #{tpu_custom_call.1} parent=1 // pred_check_branch
      %24 = sbr.rel (%p22) target = $region13
    $region12: #{tpu_custom_call.1} parent=1 // pred_region
      %vm25 = vcmask 27648
      %26 = vst.msk [vmem:[#allocation2] sm:$0xf] %vm25, 0.0
    $region13: #{tpu_custom_call.1} parent=1 // pred_fallthru
      _
    %v27 = vld [vmem:[#allocation3] sm:$0xff]
    %v28 = vld [vmem:[#allocation3 + $0x8] sm:$0xff]
    %v29 = vld [vmem:[#allocation3 + $0x10] sm:$0xff]
    %v30 = vld [vmem:[#allocation3 + $0x18] sm:$0xff]
    %v31 = vld [vmem:[#allocation3 + $0x20] sm:$0xff]
    %v32 = vld [vmem:[#allocation3 + $0x28] sm:$0xff]
    %v33 = vld [vmem:[#allocation3 + $0x30] sm:$0xff]
    %v34 = vld [vmem:[#allocation3 + $0x38] sm:$0xff]
    %v35 = vld [vmem:[#allocation3 + $0x40] sm:$0xff]
    %v36 = vld [vmem:[#allocation3 + $0x48] sm:$0xff]
    %v37 = vld [vmem:[#allocation3 + $0x50] sm:$0xf]
    %v38 = vld [vmem:[#allocation2] sm:$0xf]
    %v50 = vcombine.high %v27, %v27
    %v51 = vcombine.high %v28, %v28
    %v52 = vcombine.high %v29, %v29
    %v53 = vcombine.high %v30, %v30
    %v54 = vcombine.high %v31, %v31
    %v55 = vcombine.high %v32, %v32
    %v56 = vcombine.high %v33, %v33
    %v57 = vcombine.high %v34, %v34
    %v58 = vcombine.high %v35, %v35
    %v59 = vcombine.high %v36, %v36
    %vm70 = vcmask 326656
    %v71 = vsel %vm70, %v37, 0
    %73 = vmatprep.subr.mxu0 0.0
    %74 = vmatpush1.xpose.msra.mxu0 0.0
    %75 = vmatprep.subr.mxu0 0.0
    %76 = vmatpush1.xpose.msra.mxu0 0.0
    %77 = vmatprep.subr.mxu0 0.0
    %78 = vmatpush1.xpose.msra.mxu0 0.0
    %79 = vmatprep.subr.mxu0 0.0
    %80 = vmatpush1.xpose.msra.mxu0 0.0
    %81 = vmatprep.subr.mxu0 0.0
    %82 = vmatpush1.xpose.msra.mxu0 0.0
    %83 = vmatprep.subr.mxu0 0.0
    %84 = vmatpush1.xpose.msra.mxu0 0.0
    %85 = vmatprep.subr.mxu0 0.0
    %86 = vmatpush1.xpose.msra.mxu0 0.0
    %87 = vmatprep.subr.mxu0 0.0
    %88 = vmatpush1.xpose.msra.mxu0 0.0
    %89 = vmatprep.subr.mxu0 0.0
    %90 = vmatpush1.xpose.msra.mxu0 0.0
    %91 = vmatprep.subr.mxu0 0.0
    %92 = vmatpush1.xpose.msra.mxu0 0.0
    %93 = vmatprep.subr.mxu0 0.0
    %94 = vmatpush1.xpose.msra.mxu0 0.0
    %95 = vmatprep.subr.mxu0 0.0
    %96 = vmatpush1.xpose.msra.mxu0 0.0
    %97 = vmatprep.subr.mxu0 0.0
    %98 = vmatpush1.xpose.msra.mxu0 0.0
    %99 = vmatprep.subr.mxu0 0.0
    %100 = vmatpush1.xpose.msra.mxu0 0.0
    %101 = vmatprep.subr.mxu0 0.0
    %102 = vmatpush1.xpose.msra.mxu0 0.0
    %103 = vmatprep.subr.mxu0 %v50
    %104 = vmatpush1.xpose.msra.mxu0 %v27
    %105 = vmatprep.subr.mxu0 0.0
    %106 = vmatpush2.xpose.msra.mxu0 0.0
    %107 = vmatprep.subr.mxu0 0.0
    %108 = vmatpush2.xpose.msra.mxu0 0.0
    %109 = vmatprep.subr.mxu0 0.0
    %110 = vmatpush2.xpose.msra.mxu0 0.0
    %111 = vmatprep.subr.mxu0 0.0
    %112 = vmatpush2.xpose.msra.mxu0 0.0
    %113 = vmatprep.subr.mxu0 0.0
    %114 = vmatpush2.xpose.msra.mxu0 0.0
    %115 = vmatprep.subr.mxu0 0.0
    %116 = vmatpush2.xpose.msra.mxu0 0.0
    %117 = vmatprep.subr.mxu0 0.0
    %118 = vmatpush2.xpose.msra.mxu0 0.0
    %119 = vmatprep.subr.mxu0 0.0
    %120 = vmatpush2.xpose.msra.mxu0 0.0
    %121 = vmatprep.subr.mxu0 0.0
    %122 = vmatpush2.xpose.msra.mxu0 0.0
    %123 = vmatprep.subr.mxu0 0.0
    %124 = vmatpush2.xpose.msra.mxu0 0.0
    %125 = vmatprep.subr.mxu0 0.0
    %126 = vmatpush2.xpose.msra.mxu0 0.0
    %127 = vmatprep.subr.mxu0 0.0
    %128 = vmatpush2.xpose.msra.mxu0 0.0
    %129 = vmatprep.subr.mxu0 0.0
    %130 = vmatpush2.xpose.msra.mxu0 0.0
    %131 = vmatprep.subr.mxu0 0.0
    %132 = vmatpush2.xpose.msra.mxu0 0.0
    %133 = vmatprep.subr.mxu0 0.0
    %134 = vmatpush2.xpose.msra.mxu0 0.0
    %135 = vmatprep.subr.mxu0 0.0
    %136 = vmatpush2.xpose.msra.mxu0 0.0
    %137 = vmatprep.mubr.f32.mxu0 %v50
    %138 = vmatmul.mubr.f32.gmra.mxu0 %v27
    %v139 = vpop.f32.mrf.mxu0
    %v140 = vadd.f32 0.0, %v139
    %v141 = vpop.f32.mrf.mxu0
    %142 = vdwg.mxu0
    %143 = vmatprep.subr.mxu0 0.0
    %144 = vmatpush1.xpose.msra.mxu0 0.0
    %145 = vmatprep.subr.mxu0 0.0
    %146 = vmatpush1.xpose.msra.mxu0 0.0
    %147 = vmatprep.subr.mxu0 0.0
    %148 = vmatpush1.xpose.msra.mxu0 0.0
    %149 = vmatprep.subr.mxu0 0.0
    %150 = vmatpush1.xpose.msra.mxu0 0.0
    %151 = vmatprep.subr.mxu0 0.0
    %152 = vmatpush1.xpose.msra.mxu0 0.0
    %153 = vmatprep.subr.mxu0 0.0
    %154 = vmatpush1.xpose.msra.mxu0 0.0
    %155 = vmatprep.subr.mxu0 0.0
    %156 = vmatpush1.xpose.msra.mxu0 0.0
    %157 = vmatprep.subr.mxu0 0.0
    %158 = vmatpush1.xpose.msra.mxu0 0.0
    %159 = vmatprep.subr.mxu0 0.0
    %160 = vmatpush1.xpose.msra.mxu0 0.0
    %161 = vmatprep.subr.mxu0 0.0
    %162 = vmatpush1.xpose.msra.mxu0 0.0
    %163 = vmatprep.subr.mxu0 0.0
    %164 = vmatpush1.xpose.msra.mxu0 0.0
    %165 = vmatprep.subr.mxu0 0.0
    %166 = vmatpush1.xpose.msra.mxu0 0.0
    %167 = vmatprep.subr.mxu0 0.0
    %168 = vmatpush1.xpose.msra.mxu0 0.0
    %169 = vmatprep.subr.mxu0 0.0
    %170 = vmatpush1.xpose.msra.mxu0 0.0
    %171 = vmatprep.subr.mxu0 0.0
    %172 = vmatpush1.xpose.msra.mxu0 0.0
    %173 = vmatprep.subr.mxu0 %v51
    %174 = vmatpush1.xpose.msra.mxu0 %v28
    %175 = vmatprep.subr.mxu0 0.0
    %176 = vmatpush2.xpose.msra.mxu0 0.0
    %177 = vmatprep.subr.mxu0 0.0
    %178 = vmatpush2.xpose.msra.mxu0 0.0
    %179 = vmatprep.subr.mxu0 0.0
    %180 = vmatpush2.xpose.msra.mxu0 0.0
    %181 = vmatprep.subr.mxu0 0.0
    %182 = vmatpush2.xpose.msra.mxu0 0.0
    %183 = vmatprep.subr.mxu0 0.0
    %184 = vmatpush2.xpose.msra.mxu0 0.0
    %185 = vmatprep.subr.mxu0 0.0
    %186 = vmatpush2.xpose.msra.mxu0 0.0
    %187 = vmatprep.subr.mxu0 0.0
    %188 = vmatpush2.xpose.msra.mxu0 0.0
    %189 = vmatprep.subr.mxu0 0.0
    %190 = vmatpush2.xpose.msra.mxu0 0.0
    %191 = vmatprep.subr.mxu0 0.0
    %192 = vmatpush2.xpose.msra.mxu0 0.0
    %193 = vmatprep.subr.mxu0 0.0
    %194 = vmatpush2.xpose.msra.mxu0 0.0
    %195 = vmatprep.subr.mxu0 0.0
    %196 = vmatpush2.xpose.msra.mxu0 0.0
    %197 = vmatprep.subr.mxu0 0.0
    %198 = vmatpush2.xpose.msra.mxu0 0.0
    %199 = vmatprep.subr.mxu0 0.0
    %200 = vmatpush2.xpose.msra.mxu0 0.0
    %201 = vmatprep.subr.mxu0 0.0
    %202 = vmatpush2.xpose.msra.mxu0 0.0
    %203 = vmatprep.subr.mxu0 0.0
    %204 = vmatpush2.xpose.msra.mxu0 0.0
    %205 = vmatprep.subr.mxu0 0.0
    %206 = vmatpush2.xpose.msra.mxu0 0.0
    %207 = vmatprep.mubr.f32.mxu0 %v51
    %208 = vmatmul.mubr.f32.gmra.mxu0 %v28
    %v209 = vpop.f32.mrf.mxu0
    %v210 = vadd.f32 %v140, %v209
    %v211 = vpop.f32.mrf.mxu0
    %212 = vdwg.mxu0
    %213 = vmatprep.subr.mxu0 0.0
    %214 = vmatpush1.xpose.msra.mxu0 0.0
    %215 = vmatprep.subr.mxu0 0.0
    %216 = vmatpush1.xpose.msra.mxu0 0.0
    %217 = vmatprep.subr.mxu0 0.0
    %218 = vmatpush1.xpose.msra.mxu0 0.0
    %219 = vmatprep.subr.mxu0 0.0
    %220 = vmatpush1.xpose.msra.mxu0 0.0
    %221 = vmatprep.subr.mxu0 0.0
    %222 = vmatpush1.xpose.msra.mxu0 0.0
    %223 = vmatprep.subr.mxu0 0.0
    %224 = vmatpush1.xpose.msra.mxu0 0.0
    %225 = vmatprep.subr.mxu0 0.0
    %226 = vmatpush1.xpose.msra.mxu0 0.0
    %227 = vmatprep.subr.mxu0 0.0
    %228 = vmatpush1.xpose.msra.mxu0 0.0
    %229 = vmatprep.subr.mxu0 0.0
    %230 = vmatpush1.xpose.msra.mxu0 0.0
    %231 = vmatprep.subr.mxu0 0.0
    %232 = vmatpush1.xpose.msra.mxu0 0.0
    %233 = vmatprep.subr.mxu0 0.0
    %234 = vmatpush1.xpose.msra.mxu0 0.0
    %235 = vmatprep.subr.mxu0 0.0
    %236 = vmatpush1.xpose.msra.mxu0 0.0
    %237 = vmatprep.subr.mxu0 0.0
    %238 = vmatpush1.xpose.msra.mxu0 0.0
    %239 = vmatprep.subr.mxu0 0.0
    %240 = vmatpush1.xpose.msra.mxu0 0.0
    %241 = vmatprep.subr.mxu0 0.0
    %242 = vmatpush1.xpose.msra.mxu0 0.0
    %243 = vmatprep.subr.mxu0 %v52
    %244 = vmatpush1.xpose.msra.mxu0 %v29
    %245 = vmatprep.subr.mxu0 0.0
    %246 = vmatpush2.xpose.msra.mxu0 0.0
    %247 = vmatprep.subr.mxu0 0.0
    %248 = vmatpush2.xpose.msra.mxu0 0.0
    %249 = vmatprep.subr.mxu0 0.0
    %250 = vmatpush2.xpose.msra.mxu0 0.0
    %251 = vmatprep.subr.mxu0 0.0
    %252 = vmatpush2.xpose.msra.mxu0 0.0
    %253 = vmatprep.subr.mxu0 0.0
    %254 = vmatpush2.xpose.msra.mxu0 0.0
    %255 = vmatprep.subr.mxu0 0.0
    %256 = vmatpush2.xpose.msra.mxu0 0.0
    %257 = vmatprep.subr.mxu0 0.0
    %258 = vmatpush2.xpose.msra.mxu0 0.0
    %259 = vmatprep.subr.mxu0 0.0
    %260 = vmatpush2.xpose.msra.mxu0 0.0
    %261 = vmatprep.subr.mxu0 0.0
    %262 = vmatpush2.xpose.msra.mxu0 0.0
    %263 = vmatprep.subr.mxu0 0.0
    %264 = vmatpush2.xpose.msra.mxu0 0.0
    %265 = vmatprep.subr.mxu0 0.0
    %266 = vmatpush2.xpose.msra.mxu0 0.0
    %267 = vmatprep.subr.mxu0 0.0
    %268 = vmatpush2.xpose.msra.mxu0 0.0
    %269 = vmatprep.subr.mxu0 0.0
    %270 = vmatpush2.xpose.msra.mxu0 0.0
    %271 = vmatprep.subr.mxu0 0.0
    %272 = vmatpush2.xpose.msra.mxu0 0.0
    %273 = vmatprep.subr.mxu0 0.0
    %274 = vmatpush2.xpose.msra.mxu0 0.0
    %275 = vmatprep.subr.mxu0 0.0
    %276 = vmatpush2.xpose.msra.mxu0 0.0
    %277 = vmatprep.mubr.f32.mxu0 %v52
    %278 = vmatmul.mubr.f32.gmra.mxu0 %v29
    %v279 = vpop.f32.mrf.mxu0
    %v280 = vadd.f32 %v210, %v279
    %v281 = vpop.f32.mrf.mxu0
    %282 = vdwg.mxu0
    %283 = vmatprep.subr.mxu0 0.0
    %284 = vmatpush1.xpose.msra.mxu0 0.0
    %285 = vmatprep.subr.mxu0 0.0
    %286 = vmatpush1.xpose.msra.mxu0 0.0
    %287 = vmatprep.subr.mxu0 0.0
    %288 = vmatpush1.xpose.msra.mxu0 0.0
    %289 = vmatprep.subr.mxu0 0.0
    %290 = vmatpush1.xpose.msra.mxu0 0.0
    %291 = vmatprep.subr.mxu0 0.0
    %292 = vmatpush1.xpose.msra.mxu0 0.0
    %293 = vmatprep.subr.mxu0 0.0
    %294 = vmatpush1.xpose.msra.mxu0 0.0
    %295 = vmatprep.subr.mxu0 0.0
    %296 = vmatpush1.xpose.msra.mxu0 0.0
    %297 = vmatprep.subr.mxu0 0.0
    %298 = vmatpush1.xpose.msra.mxu0 0.0
    %299 = vmatprep.subr.mxu0 0.0
    %300 = vmatpush1.xpose.msra.mxu0 0.0
    %301 = vmatprep.subr.mxu0 0.0
    %302 = vmatpush1.xpose.msra.mxu0 0.0
    %303 = vmatprep.subr.mxu0 0.0
    %304 = vmatpush1.xpose.msra.mxu0 0.0
    %305 = vmatprep.subr.mxu0 0.0
    %306 = vmatpush1.xpose.msra.mxu0 0.0
    %307 = vmatprep.subr.mxu0 0.0
    %308 = vmatpush1.xpose.msra.mxu0 0.0
    %309 = vmatprep.subr.mxu0 0.0
    %310 = vmatpush1.xpose.msra.mxu0 0.0
    %311 = vmatprep.subr.mxu0 0.0
    %312 = vmatpush1.xpose.msra.mxu0 0.0
    %313 = vmatprep.subr.mxu0 %v53
    %314 = vmatpush1.xpose.msra.mxu0 %v30
    %315 = vmatprep.subr.mxu0 0.0
    %316 = vmatpush2.xpose.msra.mxu0 0.0
    %317 = vmatprep.subr.mxu0 0.0
    %318 = vmatpush2.xpose.msra.mxu0 0.0
    %319 = vmatprep.subr.mxu0 0.0
    %320 = vmatpush2.xpose.msra.mxu0 0.0
    %321 = vmatprep.subr.mxu0 0.0
    %322 = vmatpush2.xpose.msra.mxu0 0.0
    %323 = vmatprep.subr.mxu0 0.0
    %324 = vmatpush2.xpose.msra.mxu0 0.0
    %325 = vmatprep.subr.mxu0 0.0
    %326 = vmatpush2.xpose.msra.mxu0 0.0
    %327 = vmatprep.subr.mxu0 0.0
    %328 = vmatpush2.xpose.msra.mxu0 0.0
    %329 = vmatprep.subr.mxu0 0.0
    %330 = vmatpush2.xpose.msra.mxu0 0.0
    %331 = vmatprep.subr.mxu0 0.0
    %332 = vmatpush2.xpose.msra.mxu0 0.0
    %333 = vmatprep.subr.mxu0 0.0
    %334 = vmatpush2.xpose.msra.mxu0 0.0
    %335 = vmatprep.subr.mxu0 0.0
    %336 = vmatpush2.xpose.msra.mxu0 0.0
    %337 = vmatprep.subr.mxu0 0.0
    %338 = vmatpush2.xpose.msra.mxu0 0.0
    %339 = vmatprep.subr.mxu0 0.0
    %340 = vmatpush2.xpose.msra.mxu0 0.0
    %341 = vmatprep.subr.mxu0 0.0
    %342 = vmatpush2.xpose.msra.mxu0 0.0
    %343 = vmatprep.subr.mxu0 0.0
    %344 = vmatpush2.xpose.msra.mxu0 0.0
    %345 = vmatprep.subr.mxu0 0.0
    %346 = vmatpush2.xpose.msra.mxu0 0.0
    %347 = vmatprep.mubr.f32.mxu0 %v53
    %348 = vmatmul.mubr.f32.gmra.mxu0 %v30
    %v349 = vpop.f32.mrf.mxu0
    %v350 = vadd.f32 %v280, %v349
    %v351 = vpop.f32.mrf.mxu0
    %352 = vdwg.mxu0
    %353 = vmatprep.subr.mxu0 0.0
    %354 = vmatpush1.xpose.msra.mxu0 0.0
    %355 = vmatprep.subr.mxu0 0.0
    %356 = vmatpush1.xpose.msra.mxu0 0.0
    %357 = vmatprep.subr.mxu0 0.0
    %358 = vmatpush1.xpose.msra.mxu0 0.0
    %359 = vmatprep.subr.mxu0 0.0
    %360 = vmatpush1.xpose.msra.mxu0 0.0
    %361 = vmatprep.subr.mxu0 0.0
    %362 = vmatpush1.xpose.msra.mxu0 0.0
    %363 = vmatprep.subr.mxu0 0.0
    %364 = vmatpush1.xpose.msra.mxu0 0.0
    %365 = vmatprep.subr.mxu0 0.0
    %366 = vmatpush1.xpose.msra.mxu0 0.0
    %367 = vmatprep.subr.mxu0 0.0
    %368 = vmatpush1.xpose.msra.mxu0 0.0
    %369 = vmatprep.subr.mxu0 0.0
    %370 = vmatpush1.xpose.msra.mxu0 0.0
    %371 = vmatprep.subr.mxu0 0.0
    %372 = vmatpush1.xpose.msra.mxu0 0.0
    %373 = vmatprep.subr.mxu0 0.0
    %374 = vmatpush1.xpose.msra.mxu0 0.0
    %375 = vmatprep.subr.mxu0 0.0
    %376 = vmatpush1.xpose.msra.mxu0 0.0
    %377 = vmatprep.subr.mxu0 0.0
    %378 = vmatpush1.xpose.msra.mxu0 0.0
    %379 = vmatprep.subr.mxu0 0.0
    %380 = vmatpush1.xpose.msra.mxu0 0.0
    %381 = vmatprep.subr.mxu0 0.0
    %382 = vmatpush1.xpose.msra.mxu0 0.0
    %383 = vmatprep.subr.mxu0 %v54
    %384 = vmatpush1.xpose.msra.mxu0 %v31
    %385 = vmatprep.subr.mxu0 0.0
    %386 = vmatpush2.xpose.msra.mxu0 0.0
    %387 = vmatprep.subr.mxu0 0.0
    %388 = vmatpush2.xpose.msra.mxu0 0.0
    %389 = vmatprep.subr.mxu0 0.0
    %390 = vmatpush2.xpose.msra.mxu0 0.0
    %391 = vmatprep.subr.mxu0 0.0
    %392 = vmatpush2.xpose.msra.mxu0 0.0
    %393 = vmatprep.subr.mxu0 0.0
    %394 = vmatpush2.xpose.msra.mxu0 0.0
    %395 = vmatprep.subr.mxu0 0.0
    %396 = vmatpush2.xpose.msra.mxu0 0.0
    %397 = vmatprep.subr.mxu0 0.0
    %398 = vmatpush2.xpose.msra.mxu0 0.0
    %399 = vmatprep.subr.mxu0 0.0
    %400 = vmatpush2.xpose.msra.mxu0 0.0
    %401 = vmatprep.subr.mxu0 0.0
    %402 = vmatpush2.xpose.msra.mxu0 0.0
    %403 = vmatprep.subr.mxu0 0.0
    %404 = vmatpush2.xpose.msra.mxu0 0.0
    %405 = vmatprep.subr.mxu0 0.0
    %406 = vmatpush2.xpose.msra.mxu0 0.0
    %407 = vmatprep.subr.mxu0 0.0
    %408 = vmatpush2.xpose.msra.mxu0 0.0
    %409 = vmatprep.subr.mxu0 0.0
    %410 = vmatpush2.xpose.msra.mxu0 0.0
    %411 = vmatprep.subr.mxu0 0.0
    %412 = vmatpush2.xpose.msra.mxu0 0.0
    %413 = vmatprep.subr.mxu0 0.0
    %414 = vmatpush2.xpose.msra.mxu0 0.0
    %415 = vmatprep.subr.mxu0 0.0
    %416 = vmatpush2.xpose.msra.mxu0 0.0
    %417 = vmatprep.mubr.f32.mxu0 %v54
    %418 = vmatmul.mubr.f32.gmra.mxu0 %v31
    %v419 = vpop.f32.mrf.mxu0
    %v420 = vadd.f32 %v350, %v419
    %v421 = vpop.f32.mrf.mxu0
    %422 = vdwg.mxu0
    %423 = vmatprep.subr.mxu0 0.0
    %424 = vmatpush1.xpose.msra.mxu0 0.0
    %425 = vmatprep.subr.mxu0 0.0
    %426 = vmatpush1.xpose.msra.mxu0 0.0
    %427 = vmatprep.subr.mxu0 0.0
    %428 = vmatpush1.xpose.msra.mxu0 0.0
    %429 = vmatprep.subr.mxu0 0.0
    %430 = vmatpush1.xpose.msra.mxu0 0.0
    %431 = vmatprep.subr.mxu0 0.0
    %432 = vmatpush1.xpose.msra.mxu0 0.0
    %433 = vmatprep.subr.mxu0 0.0
    %434 = vmatpush1.xpose.msra.mxu0 0.0
    %435 = vmatprep.subr.mxu0 0.0
    %436 = vmatpush1.xpose.msra.mxu0 0.0
    %437 = vmatprep.subr.mxu0 0.0
    %438 = vmatpush1.xpose.msra.mxu0 0.0
    %439 = vmatprep.subr.mxu0 0.0
    %440 = vmatpush1.xpose.msra.mxu0 0.0
    %441 = vmatprep.subr.mxu0 0.0
    %442 = vmatpush1.xpose.msra.mxu0 0.0
    %443 = vmatprep.subr.mxu0 0.0
    %444 = vmatpush1.xpose.msra.mxu0 0.0
    %445 = vmatprep.subr.mxu0 0.0
    %446 = vmatpush1.xpose.msra.mxu0 0.0
    %447 = vmatprep.subr.mxu0 0.0
    %448 = vmatpush1.xpose.msra.mxu0 0.0
    %449 = vmatprep.subr.mxu0 0.0
    %450 = vmatpush1.xpose.msra.mxu0 0.0
    %451 = vmatprep.subr.mxu0 0.0
    %452 = vmatpush1.xpose.msra.mxu0 0.0
    %453 = vmatprep.subr.mxu0 %v55
    %454 = vmatpush1.xpose.msra.mxu0 %v32
    %455 = vmatprep.subr.mxu0 0.0
    %456 = vmatpush2.xpose.msra.mxu0 0.0
    %457 = vmatprep.subr.mxu0 0.0
    %458 = vmatpush2.xpose.msra.mxu0 0.0
    %459 = vmatprep.subr.mxu0 0.0
    %460 = vmatpush2.xpose.msra.mxu0 0.0
    %461 = vmatprep.subr.mxu0 0.0
    %462 = vmatpush2.xpose.msra.mxu0 0.0
    %463 = vmatprep.subr.mxu0 0.0
    %464 = vmatpush2.xpose.msra.mxu0 0.0
    %465 = vmatprep.subr.mxu0 0.0
    %466 = vmatpush2.xpose.msra.mxu0 0.0
    %467 = vmatprep.subr.mxu0 0.0
    %468 = vmatpush2.xpose.msra.mxu0 0.0
    %469 = vmatprep.subr.mxu0 0.0
    %470 = vmatpush2.xpose.msra.mxu0 0.0
    %471 = vmatprep.subr.mxu0 0.0
    %472 = vmatpush2.xpose.msra.mxu0 0.0
    %473 = vmatprep.subr.mxu0 0.0
    %474 = vmatpush2.xpose.msra.mxu0 0.0
    %475 = vmatprep.subr.mxu0 0.0
    %476 = vmatpush2.xpose.msra.mxu0 0.0
    %477 = vmatprep.subr.mxu0 0.0
    %478 = vmatpush2.xpose.msra.mxu0 0.0
    %479 = vmatprep.subr.mxu0 0.0
    %480 = vmatpush2.xpose.msra.mxu0 0.0
    %481 = vmatprep.subr.mxu0 0.0
    %482 = vmatpush2.xpose.msra.mxu0 0.0
    %483 = vmatprep.subr.mxu0 0.0
    %484 = vmatpush2.xpose.msra.mxu0 0.0
    %485 = vmatprep.subr.mxu0 0.0
    %486 = vmatpush2.xpose.msra.mxu0 0.0
    %487 = vmatprep.mubr.f32.mxu0 %v55
    %488 = vmatmul.mubr.f32.gmra.mxu0 %v32
    %v489 = vpop.f32.mrf.mxu0
    %v490 = vadd.f32 %v420, %v489
    %v491 = vpop.f32.mrf.mxu0
    %492 = vdwg.mxu0
    %493 = vmatprep.subr.mxu0 0.0
    %494 = vmatpush1.xpose.msra.mxu0 0.0
    %495 = vmatprep.subr.mxu0 0.0
    %496 = vmatpush1.xpose.msra.mxu0 0.0
    %497 = vmatprep.subr.mxu0 0.0
    %498 = vmatpush1.xpose.msra.mxu0 0.0
    %499 = vmatprep.subr.mxu0 0.0
    %500 = vmatpush1.xpose.msra.mxu0 0.0
    %501 = vmatprep.subr.mxu0 0.0
    %502 = vmatpush1.xpose.msra.mxu0 0.0
    %503 = vmatprep.subr.mxu0 0.0
    %504 = vmatpush1.xpose.msra.mxu0 0.0
    %505 = vmatprep.subr.mxu0 0.0
    %506 = vmatpush1.xpose.msra.mxu0 0.0
    %507 = vmatprep.subr.mxu0 0.0
    %508 = vmatpush1.xpose.msra.mxu0 0.0
    %509 = vmatprep.subr.mxu0 0.0
    %510 = vmatpush1.xpose.msra.mxu0 0.0
    %511 = vmatprep.subr.mxu0 0.0
    %512 = vmatpush1.xpose.msra.mxu0 0.0
    %513 = vmatprep.subr.mxu0 0.0
    %514 = vmatpush1.xpose.msra.mxu0 0.0
    %515 = vmatprep.subr.mxu0 0.0
    %516 = vmatpush1.xpose.msra.mxu0 0.0
    %517 = vmatprep.subr.mxu0 0.0
    %518 = vmatpush1.xpose.msra.mxu0 0.0
    %519 = vmatprep.subr.mxu0 0.0
    %520 = vmatpush1.xpose.msra.mxu0 0.0
    %521 = vmatprep.subr.mxu0 0.0
    %522 = vmatpush1.xpose.msra.mxu0 0.0
    %523 = vmatprep.subr.mxu0 %v56
    %524 = vmatpush1.xpose.msra.mxu0 %v33
    %525 = vmatprep.subr.mxu0 0.0
    %526 = vmatpush2.xpose.msra.mxu0 0.0
    %527 = vmatprep.subr.mxu0 0.0
    %528 = vmatpush2.xpose.msra.mxu0 0.0
    %529 = vmatprep.subr.mxu0 0.0
    %530 = vmatpush2.xpose.msra.mxu0 0.0
    %531 = vmatprep.subr.mxu0 0.0
    %532 = vmatpush2.xpose.msra.mxu0 0.0
    %533 = vmatprep.subr.mxu0 0.0
    %534 = vmatpush2.xpose.msra.mxu0 0.0
    %535 = vmatprep.subr.mxu0 0.0
    %536 = vmatpush2.xpose.msra.mxu0 0.0
    %537 = vmatprep.subr.mxu0 0.0
    %538 = vmatpush2.xpose.msra.mxu0 0.0
    %539 = vmatprep.subr.mxu0 0.0
    %540 = vmatpush2.xpose.msra.mxu0 0.0
    %541 = vmatprep.subr.mxu0 0.0
    %542 = vmatpush2.xpose.msra.mxu0 0.0
    %543 = vmatprep.subr.mxu0 0.0
    %544 = vmatpush2.xpose.msra.mxu0 0.0
    %545 = vmatprep.subr.mxu0 0.0
    %546 = vmatpush2.xpose.msra.mxu0 0.0
    %547 = vmatprep.subr.mxu0 0.0
    %548 = vmatpush2.xpose.msra.mxu0 0.0
    %549 = vmatprep.subr.mxu0 0.0
    %550 = vmatpush2.xpose.msra.mxu0 0.0
    %551 = vmatprep.subr.mxu0 0.0
    %552 = vmatpush2.xpose.msra.mxu0 0.0
    %553 = vmatprep.subr.mxu0 0.0
    %554 = vmatpush2.xpose.msra.mxu0 0.0
    %555 = vmatprep.subr.mxu0 0.0
    %556 = vmatpush2.xpose.msra.mxu0 0.0
    %557 = vmatprep.mubr.f32.mxu0 %v56
    %558 = vmatmul.mubr.f32.gmra.mxu0 %v33
    %v559 = vpop.f32.mrf.mxu0
    %v560 = vadd.f32 %v490, %v559
    %v561 = vpop.f32.mrf.mxu0
    %562 = vdwg.mxu0
    %563 = vmatprep.subr.mxu0 0.0
    %564 = vmatpush1.xpose.msra.mxu0 0.0
    %565 = vmatprep.subr.mxu0 0.0
    %566 = vmatpush1.xpose.msra.mxu0 0.0
    %567 = vmatprep.subr.mxu0 0.0
    %568 = vmatpush1.xpose.msra.mxu0 0.0
    %569 = vmatprep.subr.mxu0 0.0
    %570 = vmatpush1.xpose.msra.mxu0 0.0
    %571 = vmatprep.subr.mxu0 0.0
    %572 = vmatpush1.xpose.msra.mxu0 0.0
    %573 = vmatprep.subr.mxu0 0.0
    %574 = vmatpush1.xpose.msra.mxu0 0.0
    %575 = vmatprep.subr.mxu0 0.0
    %576 = vmatpush1.xpose.msra.mxu0 0.0
    %577 = vmatprep.subr.mxu0 0.0
    %578 = vmatpush1.xpose.msra.mxu0 0.0
    %579 = vmatprep.subr.mxu0 0.0
    %580 = vmatpush1.xpose.msra.mxu0 0.0
    %581 = vmatprep.subr.mxu0 0.0
    %582 = vmatpush1.xpose.msra.mxu0 0.0
    %583 = vmatprep.subr.mxu0 0.0
    %584 = vmatpush1.xpose.msra.mxu0 0.0
    %585 = vmatprep.subr.mxu0 0.0
    %586 = vmatpush1.xpose.msra.mxu0 0.0
    %587 = vmatprep.subr.mxu0 0.0
    %588 = vmatpush1.xpose.msra.mxu0 0.0
    %589 = vmatprep.subr.mxu0 0.0
    %590 = vmatpush1.xpose.msra.mxu0 0.0
    %591 = vmatprep.subr.mxu0 0.0
    %592 = vmatpush1.xpose.msra.mxu0 0.0
    %593 = vmatprep.subr.mxu0 %v57
    %594 = vmatpush1.xpose.msra.mxu0 %v34
    %595 = vmatprep.subr.mxu0 0.0
    %596 = vmatpush2.xpose.msra.mxu0 0.0
    %597 = vmatprep.subr.mxu0 0.0
    %598 = vmatpush2.xpose.msra.mxu0 0.0
    %599 = vmatprep.subr.mxu0 0.0
    %600 = vmatpush2.xpose.msra.mxu0 0.0
    %601 = vmatprep.subr.mxu0 0.0
    %602 = vmatpush2.xpose.msra.mxu0 0.0
    %603 = vmatprep.subr.mxu0 0.0
    %604 = vmatpush2.xpose.msra.mxu0 0.0
    %605 = vmatprep.subr.mxu0 0.0
    %606 = vmatpush2.xpose.msra.mxu0 0.0
    %607 = vmatprep.subr.mxu0 0.0
    %608 = vmatpush2.xpose.msra.mxu0 0.0
    %609 = vmatprep.subr.mxu0 0.0
    %610 = vmatpush2.xpose.msra.mxu0 0.0
    %611 = vmatprep.subr.mxu0 0.0
    %612 = vmatpush2.xpose.msra.mxu0 0.0
    %613 = vmatprep.subr.mxu0 0.0
    %614 = vmatpush2.xpose.msra.mxu0 0.0
    %615 = vmatprep.subr.mxu0 0.0
    %616 = vmatpush2.xpose.msra.mxu0 0.0
    %617 = vmatprep.subr.mxu0 0.0
    %618 = vmatpush2.xpose.msra.mxu0 0.0
    %619 = vmatprep.subr.mxu0 0.0
    %620 = vmatpush2.xpose.msra.mxu0 0.0
    %621 = vmatprep.subr.mxu0 0.0
    %622 = vmatpush2.xpose.msra.mxu0 0.0
    %623 = vmatprep.subr.mxu0 0.0
    %624 = vmatpush2.xpose.msra.mxu0 0.0
    %625 = vmatprep.subr.mxu0 0.0
    %626 = vmatpush2.xpose.msra.mxu0 0.0
    %627 = vmatprep.mubr.f32.mxu0 %v57
    %628 = vmatmul.mubr.f32.gmra.mxu0 %v34
    %v629 = vpop.f32.mrf.mxu0
    %v630 = vadd.f32 %v560, %v629
    %v631 = vpop.f32.mrf.mxu0
    %632 = vdwg.mxu0
    %633 = vmatprep.subr.mxu0 0.0
    %634 = vmatpush1.xpose.msra.mxu0 0.0
    %635 = vmatprep.subr.mxu0 0.0
    %636 = vmatpush1.xpose.msra.mxu0 0.0
    %637 = vmatprep.subr.mxu0 0.0
    %638 = vmatpush1.xpose.msra.mxu0 0.0
    %639 = vmatprep.subr.mxu0 0.0
    %640 = vmatpush1.xpose.msra.mxu0 0.0
    %641 = vmatprep.subr.mxu0 0.0
    %642 = vmatpush1.xpose.msra.mxu0 0.0
    %643 = vmatprep.subr.mxu0 0.0
    %644 = vmatpush1.xpose.msra.mxu0 0.0
    %645 = vmatprep.subr.mxu0 0.0
    %646 = vmatpush1.xpose.msra.mxu0 0.0
    %647 = vmatprep.subr.mxu0 0.0
    %648 = vmatpush1.xpose.msra.mxu0 0.0
    %649 = vmatprep.subr.mxu0 0.0
    %650 = vmatpush1.xpose.msra.mxu0 0.0
    %651 = vmatprep.subr.mxu0 0.0
    %652 = vmatpush1.xpose.msra.mxu0 0.0
    %653 = vmatprep.subr.mxu0 0.0
    %654 = vmatpush1.xpose.msra.mxu0 0.0
    %655 = vmatprep.subr.mxu0 0.0
    %656 = vmatpush1.xpose.msra.mxu0 0.0
    %657 = vmatprep.subr.mxu0 0.0
    %658 = vmatpush1.xpose.msra.mxu0 0.0
    %659 = vmatprep.subr.mxu0 0.0
    %660 = vmatpush1.xpose.msra.mxu0 0.0
    %661 = vmatprep.subr.mxu0 0.0
    %662 = vmatpush1.xpose.msra.mxu0 0.0
    %663 = vmatprep.subr.mxu0 %v58
    %664 = vmatpush1.xpose.msra.mxu0 %v35
    %665 = vmatprep.subr.mxu0 0.0
    %666 = vmatpush2.xpose.msra.mxu0 0.0
    %667 = vmatprep.subr.mxu0 0.0
    %668 = vmatpush2.xpose.msra.mxu0 0.0
    %669 = vmatprep.subr.mxu0 0.0
    %670 = vmatpush2.xpose.msra.mxu0 0.0
    %671 = vmatprep.subr.mxu0 0.0
    %672 = vmatpush2.xpose.msra.mxu0 0.0
    %673 = vmatprep.subr.mxu0 0.0
    %674 = vmatpush2.xpose.msra.mxu0 0.0
    %675 = vmatprep.subr.mxu0 0.0
    %676 = vmatpush2.xpose.msra.mxu0 0.0
    %677 = vmatprep.subr.mxu0 0.0
    %678 = vmatpush2.xpose.msra.mxu0 0.0
    %679 = vmatprep.subr.mxu0 0.0
    %680 = vmatpush2.xpose.msra.mxu0 0.0
    %681 = vmatprep.subr.mxu0 0.0
    %682 = vmatpush2.xpose.msra.mxu0 0.0
    %683 = vmatprep.subr.mxu0 0.0
    %684 = vmatpush2.xpose.msra.mxu0 0.0
    %685 = vmatprep.subr.mxu0 0.0
    %686 = vmatpush2.xpose.msra.mxu0 0.0
    %687 = vmatprep.subr.mxu0 0.0
    %688 = vmatpush2.xpose.msra.mxu0 0.0
    %689 = vmatprep.subr.mxu0 0.0
    %690 = vmatpush2.xpose.msra.mxu0 0.0
    %691 = vmatprep.subr.mxu0 0.0
    %692 = vmatpush2.xpose.msra.mxu0 0.0
    %693 = vmatprep.subr.mxu0 0.0
    %694 = vmatpush2.xpose.msra.mxu0 0.0
    %695 = vmatprep.subr.mxu0 0.0
    %696 = vmatpush2.xpose.msra.mxu0 0.0
    %697 = vmatprep.mubr.f32.mxu0 %v58
    %698 = vmatmul.mubr.f32.gmra.mxu0 %v35
    %v699 = vpop.f32.mrf.mxu0
    %v700 = vadd.f32 %v630, %v699
    %v701 = vpop.f32.mrf.mxu0
    %702 = vdwg.mxu0
    %703 = vmatprep.subr.mxu0 0.0
    %704 = vmatpush1.xpose.msra.mxu0 0.0
    %705 = vmatprep.subr.mxu0 0.0
    %706 = vmatpush1.xpose.msra.mxu0 0.0
    %707 = vmatprep.subr.mxu0 0.0
    %708 = vmatpush1.xpose.msra.mxu0 0.0
    %709 = vmatprep.subr.mxu0 0.0
    %710 = vmatpush1.xpose.msra.mxu0 0.0
    %711 = vmatprep.subr.mxu0 0.0
    %712 = vmatpush1.xpose.msra.mxu0 0.0
    %713 = vmatprep.subr.mxu0 0.0
    %714 = vmatpush1.xpose.msra.mxu0 0.0
    %715 = vmatprep.subr.mxu0 0.0
    %716 = vmatpush1.xpose.msra.mxu0 0.0
    %717 = vmatprep.subr.mxu0 0.0
    %718 = vmatpush1.xpose.msra.mxu0 0.0
    %719 = vmatprep.subr.mxu0 0.0
    %720 = vmatpush1.xpose.msra.mxu0 0.0
    %721 = vmatprep.subr.mxu0 0.0
    %722 = vmatpush1.xpose.msra.mxu0 0.0
    %723 = vmatprep.subr.mxu0 0.0
    %724 = vmatpush1.xpose.msra.mxu0 0.0
    %725 = vmatprep.subr.mxu0 0.0
    %726 = vmatpush1.xpose.msra.mxu0 0.0
    %727 = vmatprep.subr.mxu0 0.0
    %728 = vmatpush1.xpose.msra.mxu0 0.0
    %729 = vmatprep.subr.mxu0 0.0
    %730 = vmatpush1.xpose.msra.mxu0 0.0
    %731 = vmatprep.subr.mxu0 0.0
    %732 = vmatpush1.xpose.msra.mxu0 0.0
    %733 = vmatprep.subr.mxu0 %v59
    %734 = vmatpush1.xpose.msra.mxu0 %v36
    %735 = vmatprep.subr.mxu0 0.0
    %736 = vmatpush2.xpose.msra.mxu0 0.0
    %737 = vmatprep.subr.mxu0 0.0
    %738 = vmatpush2.xpose.msra.mxu0 0.0
    %739 = vmatprep.subr.mxu0 0.0
    %740 = vmatpush2.xpose.msra.mxu0 0.0
    %741 = vmatprep.subr.mxu0 0.0
    %742 = vmatpush2.xpose.msra.mxu0 0.0
    %743 = vmatprep.subr.mxu0 0.0
    %744 = vmatpush2.xpose.msra.mxu0 0.0
    %745 = vmatprep.subr.mxu0 0.0
    %746 = vmatpush2.xpose.msra.mxu0 0.0
    %747 = vmatprep.subr.mxu0 0.0
    %748 = vmatpush2.xpose.msra.mxu0 0.0
    %749 = vmatprep.subr.mxu0 0.0
    %750 = vmatpush2.xpose.msra.mxu0 0.0
    %751 = vmatprep.subr.mxu0 0.0
    %752 = vmatpush2.xpose.msra.mxu0 0.0
    %753 = vmatprep.subr.mxu0 0.0
    %754 = vmatpush2.xpose.msra.mxu0 0.0
    %755 = vmatprep.subr.mxu0 0.0
    %756 = vmatpush2.xpose.msra.mxu0 0.0
    %757 = vmatprep.subr.mxu0 0.0
    %758 = vmatpush2.xpose.msra.mxu0 0.0
    %759 = vmatprep.subr.mxu0 0.0
    %760 = vmatpush2.xpose.msra.mxu0 0.0
    %761 = vmatprep.subr.mxu0 0.0
    %762 = vmatpush2.xpose.msra.mxu0 0.0
    %763 = vmatprep.subr.mxu0 0.0
    %764 = vmatpush2.xpose.msra.mxu0 0.0
    %765 = vmatprep.subr.mxu0 0.0
    %766 = vmatpush2.xpose.msra.mxu0 0.0
    %767 = vmatprep.mubr.f32.mxu0 %v59
    %768 = vmatmul.mubr.f32.gmra.mxu0 %v36
    %v769 = vpop.f32.mrf.mxu0
    %v770 = vadd.f32 %v700, %v769
    %v771 = vpop.f32.mrf.mxu0
    %772 = vdwg.mxu0
    %773 = vmatprep.subr.mxu0 0.0
    %774 = vmatpush1.xpose.msra.mxu0 0.0
    %775 = vmatprep.subr.mxu0 0.0
    %776 = vmatpush1.xpose.msra.mxu0 0.0
    %777 = vmatprep.subr.mxu0 0.0
    %778 = vmatpush1.xpose.msra.mxu0 0.0
    %779 = vmatprep.subr.mxu0 0.0
    %780 = vmatpush1.xpose.msra.mxu0 0.0
    %781 = vmatprep.subr.mxu0 0.0
    %782 = vmatpush1.xpose.msra.mxu0 0.0
    %783 = vmatprep.subr.mxu0 0.0
    %784 = vmatpush1.xpose.msra.mxu0 0.0
    %785 = vmatprep.subr.mxu0 0.0
    %786 = vmatpush1.xpose.msra.mxu0 0.0
    %787 = vmatprep.subr.mxu0 0.0
    %788 = vmatpush1.xpose.msra.mxu0 0.0
    %789 = vmatprep.subr.mxu0 0.0
    %790 = vmatpush1.xpose.msra.mxu0 0.0
    %791 = vmatprep.subr.mxu0 0.0
    %792 = vmatpush1.xpose.msra.mxu0 0.0
    %793 = vmatprep.subr.mxu0 0.0
    %794 = vmatpush1.xpose.msra.mxu0 0.0
    %795 = vmatprep.subr.mxu0 0.0
    %796 = vmatpush1.xpose.msra.mxu0 0.0
    %797 = vmatprep.subr.mxu0 0.0
    %798 = vmatpush1.xpose.msra.mxu0 0.0
    %799 = vmatprep.subr.mxu0 0.0
    %800 = vmatpush1.xpose.msra.mxu0 0.0
    %801 = vmatprep.subr.mxu0 0.0
    %802 = vmatpush1.xpose.msra.mxu0 0.0
    %803 = vmatprep.subr.mxu0 0.0
    %804 = vmatpush1.xpose.msra.mxu0 %v71
    %805 = vmatprep.subr.mxu0 0.0
    %806 = vmatpush2.xpose.msra.mxu0 0.0
    %807 = vmatprep.subr.mxu0 0.0
    %808 = vmatpush2.xpose.msra.mxu0 0.0
    %809 = vmatprep.subr.mxu0 0.0
    %810 = vmatpush2.xpose.msra.mxu0 0.0
    %811 = vmatprep.subr.mxu0 0.0
    %812 = vmatpush2.xpose.msra.mxu0 0.0
    %813 = vmatprep.subr.mxu0 0.0
    %814 = vmatpush2.xpose.msra.mxu0 0.0
    %815 = vmatprep.subr.mxu0 0.0
    %816 = vmatpush2.xpose.msra.mxu0 0.0
    %817 = vmatprep.subr.mxu0 0.0
    %818 = vmatpush2.xpose.msra.mxu0 0.0
    %819 = vmatprep.subr.mxu0 0.0
    %820 = vmatpush2.xpose.msra.mxu0 0.0
    %821 = vmatprep.subr.mxu0 0.0
    %822 = vmatpush2.xpose.msra.mxu0 0.0
    %823 = vmatprep.subr.mxu0 0.0
    %824 = vmatpush2.xpose.msra.mxu0 0.0
    %825 = vmatprep.subr.mxu0 0.0
    %826 = vmatpush2.xpose.msra.mxu0 0.0
    %827 = vmatprep.subr.mxu0 0.0
    %828 = vmatpush2.xpose.msra.mxu0 0.0
    %829 = vmatprep.subr.mxu0 0.0
    %830 = vmatpush2.xpose.msra.mxu0 0.0
    %831 = vmatprep.subr.mxu0 0.0
    %832 = vmatpush2.xpose.msra.mxu0 0.0
    %833 = vmatprep.subr.mxu0 0.0
    %834 = vmatpush2.xpose.msra.mxu0 0.0
    %835 = vmatprep.subr.mxu0 0.0
    %836 = vmatpush2.xpose.msra.mxu0 0.0
    %837 = vmatprep.mubr.f32.mxu0 0.0
    %838 = vmatmul.mubr.f32.gmra.mxu0 %v71
    %v839 = vpop.f32.mrf.mxu0
    %v840 = vadd.f32 %v770, %v839
    %v841 = vpop.f32.mrf.mxu0
    %842 = vdwg.mxu0
    %v843 = vadd.f32 %v38, %v840
    %vm844 = vcmask 27648
    %845 = vst.msk [vmem:[#allocation2] sm:$0xf] %vm844, %v843
    // Predicated region
    $region14: #{tpu_custom_call.1} parent=1 // pred_check
      %p846 = pneg %p21
    $region15: #{tpu_custom_call.1} parent=1 // pred_check_branch
      %848 = sbr.rel (%p846) target = $region17
    $region16: #{tpu_custom_call.1} parent=1 // pred_region
      %v849 = vld [vmem:[#allocation2] sm:$0xf]
      %v850 = vlaneseq
      %v851 = vand.u32 %v850, 127
      %v852 = vlaneseq
      %v853 = vshrl.u32 %v852, 7
      // While loop
      $region18: #{tpu_custom_call.1} parent=16 // loop_pre_header
        _
      $region19: #{tpu_custom_call.1} parent=16 // loop_header
        %s855 = sphi 0, %s960
        %s856 = sphi 0, %s959
        %v857 = vphi 0.25, %v942
        %v858 = vphi 0.25, %v945
        %p859 = scmp.lt.s32.totalorder %s855, 250
        %p860 = scmp.eq.s32.totalorder %s856, 0
        %p861 = pnand %p859, %p860
        %p862 = pneg %p861
      $region20: #{tpu_custom_call.1} parent=16 // loop_header_branch
        %864 = sbr.rel (%p861) target = $region24
      $region21: #{tpu_custom_call.1} parent=16 // loop_body
        %v865 = vmul.f32 %v849, %v857
        %v866 = vsel %vm844, %v865, 0.0
        %867 = vadd.xlane.f32.xlu0 %v866
        %v868 = vpop.xlane.xlu0 %867
        %vm869 = vcmask 1043456
        %v870 = vsel %vm869, %v868, inf
        %v871 = vrot.slane %v870, 4
        %v872 = vmin.f32 %v870, %v871
        %v873 = vrot.slane %v872, 2
        %v874 = vmin.f32 %v872, %v873
        %v875 = vrot.slane %v874, 1
        %v876 = vmin.f32 %v874, %v875
        %s877 = vtos %v876
        %v878 = vstv %s877
        %vm879 = vcmp.eq.f32.partialorder %v868, %v878
        %v880 = vsel %vm879, %v853, 4
        %v881 = vsel %vm869, %v880, 2147483647
        %v882 = vrot.slane %v881, 4
        %vm883 = vcmp.lt.s32.totalorder %v881, %v882
        %v884 = vsel %vm883, %v881, %v882
        %v885 = vrot.slane %v884, 2
        %vm886 = vcmp.lt.s32.totalorder %v884, %v885
        %v887 = vsel %vm886, %v884, %v885
        %v888 = vrot.slane %v887, 1
        %vm889 = vcmp.lt.s32.totalorder %v887, %v888
        %v890 = vsel %vm889, %v887, %v888
        %s891 = vtos %v890
        %v892 = vstv %s891
        %vm893 = vcmp.eq.s32.totalorder %v851, %v892
        %v894 = vsel %vm893, 1, 0
        %v895 = vcvt.s32.f32 %v894
        %vm896 = vcmp.eq.s32.totalorder %v853, %v892
        %v897 = vsel %vm896, 1, 0
        %v898 = vcvt.s32.f32 %v897
        %v899 = vmul.f32 %v858, %v868
        %vm900 = vcmask 3072
        %v901 = vsel %vm900, %v899, 0.0
        %902 = vadd.xlane.f32.xlu0 %v901
        %v903 = vpop.xlane.xlu0 %902
        %v904 = vrot.slane %v903, 4
        %v905 = vadd.f32 %v903, %v904
        %v906 = vrot.slane %v905, 2
        %v907 = vadd.f32 %v905, %v906
        %v908 = vrot.slane %v907, 1
        %v909 = vadd.f32 %v907, %v908
        %s910 = vtos %v909
        %v911 = vmul.f32 %v898, %v895
        %v912 = vmul.f32 %v849, %v911
        %v913 = vsel %vm844, %v912, 0.0
        %914 = vadd.xlane.f32.xlu0 %v913
        %v915 = vpop.xlane.xlu0 %914
        %v916 = vrot.slane %v915, 4
        %v917 = vadd.f32 %v915, %v916
        %v918 = vrot.slane %v917, 2
        %v919 = vadd.f32 %v917, %v918
        %v920 = vrot.slane %v919, 1
        %v921 = vadd.f32 %v919, %v920
        %s922 = vtos %v921
        %s923 = sadd.f32 %s910, %s922
        %s924 = smul.f32 %s877, 2.0
        %s925 = ssub.f32 %s923, %s924
        %p926 = scmp.eq.f32.partialorder %s925, 0.0
        %s927 = scalar_select %p926, 1.0, %s925
        %s928 = ssub.f32 %s922, %s877
        %v929 = vstv %s927
        %v930 = vrcp.pop %v929
        %s931 = vtos %v930
        %s932 = smul.f32 %s928, %s931
        %p933 = scmp.ge.f32.partialorder %s877, %s910
        %p934 = scmp.ge.f32.partialorder %s877, %s922
        %s935 = scalar_select %p934, 0.001, %s932
        %s936 = scalar_select %p933, 0.999, %s935
        %v937 = vstv %s936
        %v938 = vmul.f32 %v937, %v857
        %s939 = ssub.f32 1.0, %s936
        %v940 = vstv %s939
        %v941 = vmul.f32 %v940, %v895
        %v942 = vadd.f32 %v938, %v941
        %v943 = vmul.f32 %v937, %v858
        %v944 = vmul.f32 %v940, %v898
        %v945 = vadd.f32 %v943, %v944
        %v946 = vsub.f32 %v945, %v858
        %v947 = vand.u32 2147483647, %v946
        %v948 = vsel %vm900, %v947, 0.0
        %949 = vadd.xlane.f32.xlu0 %v948
        %v950 = vpop.xlane.xlu0 %949
        %v951 = vrot.slane %v950, 4
        %v952 = vadd.f32 %v950, %v951
        %v953 = vrot.slane %v952, 2
        %v954 = vadd.f32 %v952, %v953
        %v955 = vrot.slane %v954, 1
        %v956 = vadd.f32 %v954, %v955
        %s957 = vtos %v956
        %p958 = scmp.lt.f32.partialorder %s957, 1e-06
        %s959 = scalar_select %p958, 1, 0
        %s960 = sadd.s32 %s855, 1
      $region22: #{tpu_custom_call.1} parent=16 // loop_footer
        _
      $region23: #{tpu_custom_call.1} parent=16 // loop_footer_branch
        %854 = sbr.rel target = $region19
      $region24: #{tpu_custom_call.1} parent=16 // loop_exit
        _
      %vm961 = vcmask 24576
      %962 = vst.msk [vmem:[#allocation6] sm:$0x1] %vm961, %v857
    $region17: #{tpu_custom_call.1} parent=1 // pred_fallthru
      _
    // Predicated region
    $region25: #{tpu_custom_call.1} parent=1 // pred_check
      _
    $region26: #{tpu_custom_call.1} parent=1 // pred_check_branch
      %964 = sbr.rel (0) target = $region28
    $region27: #{tpu_custom_call.1} parent=1 // pred_region
      %s966 = ssub.s32 16, 16
      %967 = vsyncadd [#allocation5], %s966
      %s969 = sshll.u32 [#allocation6], 4
      %s970 = int_to_ptr.vmem [resolvable:$true] %s969
      %972 = dma.vmem_to_hbm [thread:$0]  %s970, 16, %s1, [#allocation5]
    $region28: #{tpu_custom_call.1} parent=1 // pred_fallthru
      _
    // Predicated region
    $region29: #{tpu_custom_call.1} parent=1 // pred_check
      _
    $region30: #{tpu_custom_call.1} parent=1 // pred_check_branch
      %974 = sbr.rel (0) target = $region32
    $region31: #{tpu_custom_call.1} parent=1 // pred_region
      %975 = dma.done [#allocation5], 16
    $region32: #{tpu_custom_call.1} parent=1 // pred_fallthru
      _
    %976 = vsyncpa [#allocation4], 1
    %977 = vsyncpa [#allocation5], 1

</llo_original>
